<compile_context>
chip_gen: v7x
topology: tpu7x:2x2x1
jax: 0.10.0
libtpu: 0.0.40
codegen_flags: <defaults>
</compile_context>

<pallas_src>
import functools

import jax
import jax.numpy as jnp
from jax.experimental import pallas as pl
from jax.experimental.pallas import tpu as pltpu


def _focal_nll_kernel(logits_ref, targets_ref, psum_ref, *, n_rows, block_rows):
    """One grid step: partial sum of per-row NLL over a (TB, C) logits tile."""
    i = pl.program_id(0)
    x = logits_ref[...].astype(jnp.float32)            # [TB, C] f32 math
    t = targets_ref[...]                                # [TB, 1] int32

    # Fused one-hot gather against the raw logits (single traversal -> x_t).
    cls = jax.lax.broadcasted_iota(jnp.int32, x.shape, 1)               # [TB, C]
    x_t = jnp.sum(jnp.where(cls == t, x, 0.0), axis=-1, keepdims=True)  # [TB, 1]

    # Numerically stable LSE; exp/sum/log kept in f32.
    m = jnp.max(x, axis=-1, keepdims=True)                               # [TB, 1]
    lse = jnp.log(jnp.sum(jnp.exp(x - m), axis=-1, keepdims=True))       # [TB, 1]

    nll = (m + lse) - x_t                                                # [TB, 1]

    # Mask rows beyond the true batch (the ragged last block reads garbage
    # there; rows are independent so garbage cannot contaminate valid rows).
    row = i * block_rows + jax.lax.broadcasted_iota(jnp.int32, nll.shape, 0)
    nll = jnp.where(row < n_rows, nll, 0.0)

    # One lane-dense (8,128) vreg per block: partial sum broadcast across it.
    psum_ref[...] = jnp.zeros(psum_ref.shape, jnp.float32) + jnp.sum(nll)


def _vmem_capacity_bytes() -> int:
    try:
        return int(pltpu.get_tpu_info().vmem_capacity_bytes)
    except Exception:
        return 64 * 1024 * 1024  # conservative (v7x-sized) fallback


def _choose_block_rows(n_rows: int, n_classes: int, itemsize: int,
                       vmem_capacity: int) -> int:
    """Largest batch tile whose double-buffered input block + f32 temporaries
    fit the per-generation VMEM budget; multiple of 8; >= 2 grid steps when
    there is enough work (v7x has 2 TensorCores)."""
    # Per-row footprint: 2x double-buffered input block + ~4 f32 [TB, C]
    # temporaries (f32 cast, shifted, exp, one-hot/select) kept live in VMEM.
    per_row = 2 * n_classes * itemsize + 4 * n_classes * 4
    budget = min(vmem_capacity // 2, 48 * 1024 * 1024)
    tb = max(8, (budget // max(1, per_row)) // 8 * 8)
    if n_rows >= 16:
        half = ((-(-n_rows // 2)) + 7) // 8 * 8   # ceil(B/2) rounded up to 8
        tb = min(tb, half)                         # -> grid has >= 2 steps
    padded = (n_rows + 7) // 8 * 8
    return max(8, min(tb, padded))


@functools.partial(jax.jit, static_argnames=("gamma", "block_rows", "vmem_limit"))
def _focal_loss_impl(logits, targets, gamma, block_rows, vmem_limit):
    B, C = logits.shape
    tb = block_rows
    nb = pl.cdiv(B, tb)
    itemsize = jnp.dtype(logits.dtype).itemsize

    targets_2d = targets.astype(jnp.int32).reshape(B, 1)
    kernel = functools.partial(_focal_nll_kernel, n_rows=B, block_rows=tb)

    cost = pl.CostEstimate(
        flops=int(7 * B * C),
        transcendentals=int(B * (C + 1)),            # exp per element + log per row
        bytes_accessed=int(B * C * itemsize + B * 4 + nb * 8 * 128 * 4),
    )

    psums = pl.pallas_call(
        kernel,
        out_shape=jax.ShapeDtypeStruct((nb * 8, 128), jnp.float32),
        grid=(nb,),
        in_specs=[
            pl.BlockSpec((tb, C), lambda i: (i, 0)),
            pl.BlockSpec((tb, 1), lambda i: (i, 0)),
        ],
        out_specs=pl.BlockSpec((8, 128), lambda i: (i, 0)),   # disjoint per block
        compiler_params=pltpu.CompilerParams(
            dimension_semantics=("parallel",),        # megacore-shardable on v7x
            vmem_limit_bytes=int(vmem_limit),
        ),
        cost_estimate=cost,
    )(logits, targets_2d)

    # Tiny scalar epilogue: mean CE over valid rows, then focal modulation.
    ce = jnp.sum(psums.reshape(nb, 8, 128)[:, 0, 0]) / jnp.float32(B)
    pt = jnp.exp(-ce)
    om = jnp.maximum(1.0 - pt, 0.0)                   # robust to pt ~ 1+eps
    g = float(gamma)
    if g == int(g) and g >= 0:
        mod = jnp.float32(1.0)
        for _ in range(int(g)):                        # gamma=2 -> om*om, no pow
            mod = mod * om
    else:
        mod = om ** jnp.float32(g)                     # non-integer gamma fallback
    return mod * ce


def focal_loss(logits, targets, gamma: float = 2.0, block_rows: int | None = None):
    """logits: [B, C] float (f32 or bf16); targets: [B] int class indices.
    Returns the scalar focal loss (f32), matching the PyTorch module."""
    B, C = logits.shape
    itemsize = jnp.dtype(logits.dtype).itemsize
    cap = _vmem_capacity_bytes()
    tb = block_rows if block_rows is not None else _choose_block_rows(B, C, itemsize, cap)
    assert tb % 8 == 0, "block_rows must be a multiple of 8"

    # Explicit scoped-VMEM limit: double-buffered input + f32 temporaries
    # + targets + output vreg + slack, clamped below physical capacity.
    per_row = 2 * C * itemsize + 4 * C * 4
    est = tb * per_row + 4 * tb * 4 + 2 * 8 * 128 * 4 + (1 << 20)
    vmem_limit = min(int(cap * 0.9), max(est + (8 << 20), 32 << 20))

    return _focal_loss_impl(logits, targets, gamma=float(gamma),
                            block_rows=int(tb), vmem_limit=int(vmem_limit))


def _focal_loss_ref(inputs, targets, gamma=2.0):
    # Pure-JAX reference for sanity checking.
    logp = jax.nn.log_softmax(inputs.astype(jnp.float32), axis=-1)
    nll = -jnp.take_along_axis(logp, targets[:, None].astype(jnp.int32), axis=-1)[:, 0]
    ce = jnp.mean(nll)
    pt = jnp.exp(-ce)
    return (1.0 - pt) ** gamma * ce


if __name__ == "__main__":
    key = jax.random.PRNGKey(0)
    k1, k2, k3, k4, k5, k6 = jax.random.split(key, 6)

    # Small shape consistent with the module: [B, C] logits, [B] int targets.
    B, C = 8, 32
    logits = jax.random.normal(k1, (B, C), dtype=jnp.float32)
    targets = jax.random.randint(k2, (B,), 0, C, dtype=jnp.int32)
    out = jax.block_until_ready(focal_loss(logits, targets, gamma=2.0))
    ref = _focal_loss_ref(logits, targets, gamma=2.0)
    assert jnp.allclose(out, ref, rtol=1e-5, atol=1e-5), (out, ref)

    # Ragged batch + forced small tile: multi-block grid, last-block masking.
    B2, C2 = 36, 16
    logits2 = jax.random.normal(k3, (B2, C2), dtype=jnp.float32)
    targets2 = jax.random.randint(k4, (B2,), 0, C2, dtype=jnp.int32)
    out2 = jax.block_until_ready(focal_loss(logits2, targets2, gamma=2.0, block_rows=16))
    ref2 = _focal_loss_ref(logits2, targets2, gamma=2.0)
    assert jnp.allclose(out2, ref2, rtol=1e-5, atol=1e-5), (out2, ref2)

    # Auto block sizing: >= 2 grid steps and a ragged final block, no padding.
    B3, C3 = 100, 64
    logits3 = jax.random.normal(k5, (B3, C3), dtype=jnp.float32)
    targets3 = jax.random.randint(k6, (B3,), 0, C3, dtype=jnp.int32)
    out3 = jax.block_until_ready(focal_loss(logits3, targets3, gamma=2.0))
    ref3 = _focal_loss_ref(logits3, targets3, gamma=2.0)
    assert jnp.allclose(out3, ref3, rtol=1e-5, atol=1e-5), (out3, ref3)

    print("KERNEL_OK")
</pallas_src>

<mosaic_0001>
module attributes {stable_mosaic.version = 11 : i64} {
  func.func @_focal_nll_kernel(%arg0: i32, %arg1: memref<8x32xf32, #tpu.memory_space<vmem>>, %arg2: memref<8x1xi32, #tpu.memory_space<vmem>>, %arg3: memref<8x128xf32, #tpu.memory_space<vmem>>) attributes {dimension_semantics = [#tpu.dimension_semantics<parallel>], iteration_bounds = array<i64: 1>, scalar_prefetch = 0 : i64, scratch_operands = 0 : i64, tpu.core_type = #tpu.core_type<tc>, window_params = [{transform_indices = @transform_0, window_bounds = array<i64: 8, 32>}, {transform_indices = @transform_1, window_bounds = array<i64: 8, 1>}, {transform_indices = @transform_2, window_bounds = array<i64: 8, 128>}]} {
    %c0 = arith.constant 0 : index
    %c0_0 = arith.constant 0 : index
    %0 = vector.load %arg1[%c0, %c0_0] : memref<8x32xf32, #tpu.memory_space<vmem>>, vector<8x32xf32>
    %c0_1 = arith.constant 0 : index
    %c0_2 = arith.constant 0 : index
    %1 = vector.load %arg2[%c0_1, %c0_2] : memref<8x1xi32, #tpu.memory_space<vmem>>, vector<8x1xi32>
    %2 = tpu.iota {dimensions = array<i32: 1>} : vector<8x32xi32>
    %3 = vector.broadcast %1 : vector<8x1xi32> to vector<8x32xi32>
    %4 = arith.cmpi eq, %2, %3 : vector<8x32xi32>
    %cst = arith.constant 0.000000e+00 : f32
    %5 = vector.broadcast %cst : f32 to vector<8x32xf32>
    %6 = arith.select %4, %0, %5 : vector<8x32xi1>, vector<8x32xf32>
    %cst_3 = arith.constant dense<0.000000e+00> : vector<8xf32>
    %7 = vector.multi_reduction <add>, %6, %cst_3 [1] : vector<8x32xf32> to vector<8xf32>
    %8 = vector.shape_cast %7 : vector<8xf32> to vector<8x1xf32>
    %cst_4 = arith.constant dense<0xFF800000> : vector<8xf32>
    %9 = vector.multi_reduction <maximumf>, %0, %cst_4 [1] : vector<8x32xf32> to vector<8xf32>
    %10 = vector.shape_cast %9 : vector<8xf32> to vector<8x1xf32>
    %11 = vector.broadcast %10 : vector<8x1xf32> to vector<8x32xf32>
    %12 = arith.subf %0, %11 : vector<8x32xf32>
    %13 = math.exp %12 : vector<8x32xf32>
    %cst_5 = arith.constant dense<0.000000e+00> : vector<8xf32>
    %14 = vector.multi_reduction <add>, %13, %cst_5 [1] : vector<8x32xf32> to vector<8xf32>
    %15 = vector.shape_cast %14 : vector<8xf32> to vector<8x1xf32>
    %16 = math.log %15 : vector<8x1xf32>
    %17 = arith.addf %10, %16 : vector<8x1xf32>
    %18 = arith.subf %17, %8 : vector<8x1xf32>
    %c8_i32 = arith.constant 8 : i32
    %19 = arith.muli %arg0, %c8_i32 : i32
    %20 = tpu.iota {dimensions = array<i32: 0>} : vector<8x1xi32>
    %21 = vector.broadcast %19 : i32 to vector<8x1xi32>
    %22 = arith.addi %21, %20 : vector<8x1xi32>
    %c8_i32_6 = arith.constant 8 : i32
    %23 = vector.broadcast %c8_i32_6 : i32 to vector<8x1xi32>
    %24 = arith.cmpi slt, %22, %23 : vector<8x1xi32>
    %cst_7 = arith.constant 0.000000e+00 : f32
    %25 = vector.broadcast %cst_7 : f32 to vector<8x1xf32>
    %26 = arith.select %24, %18, %25 : vector<8x1xi1>, vector<8x1xf32>
    %cst_8 = arith.constant 0.000000e+00 : f32
    %27 = vector.broadcast %cst_8 : f32 to vector<8x128xf32>
    %28 = vector.shape_cast %26 : vector<8x1xf32> to vector<1x8x1xf32>
    %cst_9 = arith.constant dense<0.000000e+00> : vector<1xf32>
    %29 = vector.multi_reduction <add>, %28, %cst_9 [1, 2] : vector<1x8x1xf32> to vector<1xf32>
    %30 = vector.shape_cast %29 : vector<1xf32> to vector<1x1x1xf32>
    %31 = vector.extract %30[0, 0, 0] : f32 from vector<1x1x1xf32>
    %32 = vector.broadcast %31 : f32 to vector<8x128xf32>
    %33 = arith.addf %27, %32 : vector<8x128xf32>
    %c0_10 = arith.constant 0 : index
    %c0_11 = arith.constant 0 : index
    %34 = vector.load %arg3[%c0_10, %c0_11] : memref<8x128xf32, #tpu.memory_space<vmem>>, vector<8x128xf32>
    tpu.vector_store %arg3[%c0_10, %c0_11], %33 {strides = array<i32>} : memref<8x128xf32, #tpu.memory_space<vmem>>, vector<8x128xf32>,
    return
  }
  func.func @transform_0(%arg0: i32) -> (i32, i32) {
    %c0_i32 = arith.constant 0 : i32
    %c0_i32_0 = arith.constant 0 : i32
    return %arg0, %c0_i32 : i32, i32
  }
  func.func @transform_1(%arg0: i32) -> (i32, i32) {
    %c0_i32 = arith.constant 0 : i32
    %c0_i32_0 = arith.constant 0 : i32
    return %arg0, %c0_i32 : i32, i32
  }
  func.func @transform_2(%arg0: i32) -> (i32, i32) {
    %c0_i32 = arith.constant 0 : i32
    %c0_i32_0 = arith.constant 0 : i32
    return %arg0, %c0_i32 : i32, i32
  }
}

</mosaic_0001>

<llo_original>
// kernel: _focal_loss_impl.1
$region0: #{_focal_loss_impl.1}
  #allocation0 [shape = 'u32[]', space=smem, size = 0x4, offset = 0x4, fixed_abs, tag = 'smem constant byte address 0x4 - core index']
  #allocation1 [shape = 'u32[144,128]{1,0:T(1,128)}', space=vmem, size = 0x12000, scoped, tag = 'internal scratch']
  %s0 = inlined_call_operand.vmem [shape: f32[8,32], index: 0, kind: input, shape index: {}]
  %s1 = inlined_call_operand.vmem [shape: s32[8,1], index: 1, kind: input, shape index: {}]
  %s2 = inlined_call_operand.vmem [shape: f32[8,128], index: 2, kind: output, shape index: {}]
  %s3 = sld [smem:[#allocation0]]
  $region18: #{_focal_loss_impl.1} parent=0
    _
  %s5 = ssub.s32 1, %s3
  %s6 = scalar_select 0, %s5, %s3
  // Predicated region
  $region2: #{_focal_loss_impl.1} parent=0 // pred_check
    _
  $region3: #{_focal_loss_impl.1} parent=0 // pred_check_branch
    %8 = sbr.rel (0) target = $region5
  $region4: #{_focal_loss_impl.1} parent=0 // pred_region
    _
  $region5: #{_focal_loss_impl.1} parent=0 // pred_fallthru
    _
  // Predicated region
  $region6: #{_focal_loss_impl.1} parent=0 // pred_check
    _
  $region7: #{_focal_loss_impl.1} parent=0 // pred_check_branch
    %10 = sbr.rel (0) target = $region9
  $region8: #{_focal_loss_impl.1} parent=0 // pred_region
    _
  $region9: #{_focal_loss_impl.1} parent=0 // pred_fallthru
    _
  %v11 = vld [vmem:[%s0] sm:$0xff]
  %v12 = vld [vmem:[%s1] sm:$0xff]
  %v13 = vlaneseq
  %v14 = vand.u32 %v13, 127
  %15 = vset.pattern.permute.xlu0 0
  %16 = vperm.xlu0 %15, %v12
  %v17 = vpop.permute.xlu0 %16
  %vm18 = vcmp.eq.s32.totalorder %v14, %v17
  %v19 = vsel %vm18, %v11, 0.0
  %vm20 = vcmask 261120
  %v21 = vsel %vm20, %v19, 0.0
  %22 = vadd.xlane.f32.xlu0 %v21
  %v23 = vpop.xlane.xlu0 %22
  %v24 = vsel %vm20, %v11, -inf
  %25 = vmax.xlane.f32.xlu0 %v24
  %v26 = vpop.xlane.xlu0 %25
  %v27 = vsub.f32 %v11, %v26
  %v28 = vmul.f32 %v27, 1.442695
  %v29 = vpow.pop %v28
  %v30 = vsel %vm20, %v29, 0.0
  %31 = vadd.xlane.f32.xlu0 %v30
  %v32 = vpop.xlane.xlu0 %31
  %v33 = vlog2.pop %v32
  %v34 = vmul.f32 %v33, 0.6931472
  %v35 = vadd.f32 %v26, %v34
  %v36 = vsub.f32 %v35, %v23
  %s37 = smul.u32 0, 8
  %v38 = vlaneseq
  %v39 = vshrl.u32 %v38, 7
  %v40 = vstv %s37
  %v41 = vadd.s32 %v40, %v39
  %vm42 = vcmp.lt.s32.totalorder %v41, 8
  %v43 = vsel %vm42, %v36, 0.0
  %vm44 = vcmask 7168
  %v45 = vsel %vm44, %v43, 0.0
  %46 = vadd.xlane.f32.xlu0 %v45
  %v47 = vpop.xlane.xlu0 %46
  %v48 = vrot.slane %v47, 4
  %v49 = vadd.f32 %v47, %v48
  %v50 = vrot.slane %v49, 2
  %v51 = vadd.f32 %v49, %v50
  %v52 = vrot.slane %v51, 1
  %v53 = vadd.f32 %v51, %v52
  %s54 = vtos %v53
  %v55 = vstv %s54
  %v56 = vadd.f32 %v55, 0.0
  %57 = vst [vmem:[%s2] sm:$0xff] %v56
  // Predicated region
  $region10: #{_focal_loss_impl.1} parent=0 // pred_check
    _
  $region11: #{_focal_loss_impl.1} parent=0 // pred_check_branch
    %59 = sbr.rel (0) target = $region13
  $region12: #{_focal_loss_impl.1} parent=0 // pred_region
    _
  $region13: #{_focal_loss_impl.1} parent=0 // pred_fallthru
    _
  // Predicated region
  $region14: #{_focal_loss_impl.1} parent=0 // pred_check
    _
  $region15: #{_focal_loss_impl.1} parent=0 // pred_check_branch
    %61 = sbr.rel (0) target = $region17
  $region16: #{_focal_loss_impl.1} parent=0 // pred_region
    _
  $region17: #{_focal_loss_impl.1} parent=0 // pred_fallthru
    _

</llo_original>
